<compile_context>
chip_gen: v6e
topology: v6e:2x2x1
jax: 0.10.0
libtpu: 0.0.40
codegen_flags: <defaults>
</compile_context>

<pallas_src>
import functools

import jax
import jax.numpy as jnp
from jax.experimental import pallas as pl
from jax.experimental.pallas import tpu as pltpu


def dqn_kernel(x_ref, w1_ref, b1_ref, w2_ref, b2_ref, w3_ref, b3_ref, out_ref):
    # Fused 3-layer MLP on one batch tile: 3 MXU matmuls (bf16 in, f32 acc)
    # + f32 VPU bias/ReLU epilogue.
    x = x_ref[...].astype(jnp.bfloat16)
    b1 = b1_ref[...]          # (1, Hp) f32, read once, single broadcast per layer
    b2 = b2_ref[...]
    b3 = b3_ref[...]

    h1 = jnp.dot(x, w1_ref[...], preferred_element_type=jnp.float32) + b1
    h1 = jnp.maximum(h1, 0.0).astype(jnp.bfloat16)

    h2 = jnp.dot(h1, w2_ref[...], preferred_element_type=jnp.float32) + b2
    h2 = jnp.maximum(h2, 0.0).astype(jnp.bfloat16)

    out_ref[...] = jnp.dot(h2, w3_ref[...], preferred_element_type=jnp.float32) + b3


def _round_up(n, m):
    return (n + m - 1) // m * m


def dqn_forward(x, params, *, block_batch=256):
    """Fused DQN forward.

    x: (B, state_size) f32.  params: w1 (S,H), b1 (1,H), w2 (H,H), b2 (1,H),
    w3 (H,A), b3 (1,A)  (i.e. x @ W + b per layer, same math as nn.Linear).
    Returns (B, action_size) f32.
    """
    w1, b1, w2, b2, w3, b3 = (params[k] for k in ("w1", "b1", "w2", "b2", "w3", "b3"))
    B, S = x.shape
    H = w1.shape[1]
    A = w3.shape[1]

    LANE = 128
    Hp = _round_up(H, LANE)                      # lane-dense hidden
    Ap = _round_up(A, LANE)                      # lane-dense output
    tm = min(block_batch, _round_up(B, 8))       # sublane-aligned batch tile
    Bp = _round_up(B, tm)
    grid = (Bp // tm,)

    # Zero-pad feature dims (mathematically inert: zero weight cols + zero bias
    # -> padded hidden activations are 0 after ReLU; padded output cols are 0).
    pad2 = lambda a, r, c: jnp.pad(a, ((0, r - a.shape[0]), (0, c - a.shape[1])))
    w1p = pad2(w1, S, Hp).astype(jnp.bfloat16)
    w2p = pad2(w2, Hp, Hp).astype(jnp.bfloat16)
    w3p = pad2(w3, Hp, Ap).astype(jnp.bfloat16)
    b1p = pad2(b1.reshape(1, -1), 1, Hp).astype(jnp.float32)
    b2p = pad2(b2.reshape(1, -1), 1, Hp).astype(jnp.float32)
    b3p = pad2(b3.reshape(1, -1), 1, Ap).astype(jnp.float32)
    xp = jnp.pad(x.astype(jnp.float32), ((0, Bp - B), (0, 0)))

    flops = 2 * Bp * (S * Hp + Hp * Hp + Hp * Ap)
    bytes_accessed = (
        xp.size * 4
        + (w1p.size + w2p.size + w3p.size) * 2
        + (b1p.size + b2p.size + b3p.size) * 4
        + Bp * Ap * 4
    )

    # Weights/biases: constant block index -> stay resident in VMEM across the grid.
    resident = lambda a: pl.BlockSpec(a.shape, lambda i: (0, 0))

    out = pl.pallas_call(
        dqn_kernel,
        out_shape=jax.ShapeDtypeStruct((Bp, Ap), jnp.float32),
        grid=grid,
        in_specs=[
            pl.BlockSpec((tm, S), lambda i: (i, 0)),    # x: tiled over batch
            resident(w1p), resident(b1p),
            resident(w2p), resident(b2p),
            resident(w3p), resident(b3p),
        ],
        out_specs=pl.BlockSpec((tm, Ap), lambda i: (i, 0)),
        compiler_params=pltpu.CompilerParams(dimension_semantics=("parallel",)),
        cost_estimate=pl.CostEstimate(
            flops=flops, transcendentals=0, bytes_accessed=bytes_accessed
        ),
    )(xp, w1p, b1p, w2p, b2p, w3p, b3p)

    return out[:B, :A]


def init_params(key, state_size, action_size, hidden_size=64):
    """Deterministic synthetic init (shapes match the module's nn.Linear layers)."""
    ks = jax.random.split(key, 6)
    scale = 0.1
    return {
        "w1": scale * jax.random.normal(ks[0], (state_size, hidden_size), jnp.float32),
        "b1": scale * jax.random.normal(ks[1], (1, hidden_size), jnp.float32),
        "w2": scale * jax.random.normal(ks[2], (hidden_size, hidden_size), jnp.float32),
        "b2": scale * jax.random.normal(ks[3], (1, hidden_size), jnp.float32),
        "w3": scale * jax.random.normal(ks[4], (hidden_size, action_size), jnp.float32),
        "b3": scale * jax.random.normal(ks[5], (1, action_size), jnp.float32),
    }


def dqn_reference(x, p):
    # Mirror the kernel's numerics: bf16 matmul inputs, f32 accumulation/epilogue.
    c = lambda a: a.astype(jnp.bfloat16).astype(jnp.float32)
    dot = lambda a, b: jnp.dot(a, b, precision=jax.lax.Precision.HIGHEST)
    h1 = jnp.maximum(dot(c(x), c(p["w1"])) + p["b1"], 0.0)
    h2 = jnp.maximum(dot(c(h1), c(p["w2"])) + p["b2"], 0.0)
    return dot(c(h2), c(p["w3"])) + p["b3"]


if __name__ == "__main__":
    key = jax.random.PRNGKey(0)
    state_size, action_size, hidden_size = 16, 8, 64

    kx, kp, kx2 = jax.random.split(key, 3)
    params = init_params(kp, state_size, action_size, hidden_size)
    fwd = jax.jit(functools.partial(dqn_forward))

    # Small batch (single grid step, padded 4 -> 8 rows).
    x = jax.random.normal(kx, (4, state_size), jnp.float32)
    out = fwd(x, params)
    jax.block_until_ready(out)
    ref = dqn_reference(x, params)
    assert out.shape == (4, action_size)
    assert jnp.allclose(out, ref, atol=1e-3, rtol=1e-3), float(jnp.abs(out - ref).max())

    # Replay-sized batch exercising the batch grid (300 -> 512 padded, 2 tiles of 256).
    x2 = jax.random.normal(kx2, (300, state_size), jnp.float32)
    out2 = fwd(x2, params)
    jax.block_until_ready(out2)
    ref2 = dqn_reference(x2, params)
    assert out2.shape == (300, action_size)
    assert jnp.allclose(out2, ref2, atol=1e-3, rtol=1e-3), float(jnp.abs(out2 - ref2).max())

    print("KERNEL_OK")
</pallas_src>

<mosaic_0001>
module attributes {stable_mosaic.version = 11 : i64} {
  func.func @dqn_kernel(%arg0: i32, %arg1: memref<8x16xf32, #tpu.memory_space<vmem>>, %arg2: memref<16x128xbf16, #tpu.memory_space<vmem>>, %arg3: memref<1x128xf32, #tpu.memory_space<vmem>>, %arg4: memref<128x128xbf16, #tpu.memory_space<vmem>>, %arg5: memref<1x128xf32, #tpu.memory_space<vmem>>, %arg6: memref<128x128xbf16, #tpu.memory_space<vmem>>, %arg7: memref<1x128xf32, #tpu.memory_space<vmem>>, %arg8: memref<8x128xf32, #tpu.memory_space<vmem>>) attributes {dimension_semantics = [#tpu.dimension_semantics<parallel>], iteration_bounds = array<i64: 1>, scalar_prefetch = 0 : i64, scratch_operands = 0 : i64, tpu.core_type = #tpu.core_type<tc>, window_params = [{transform_indices = @transform_0, window_bounds = array<i64: 8, 16>}, {pipeline_mode = #tpu.pipeline_mode<synchronous>, transform_indices = @transform_1, window_bounds = array<i64: 16, 128>}, {pipeline_mode = #tpu.pipeline_mode<synchronous>, transform_indices = @transform_2, window_bounds = array<i64: 1, 128>}, {pipeline_mode = #tpu.pipeline_mode<synchronous>, transform_indices = @transform_3, window_bounds = array<i64: 128, 128>}, {pipeline_mode = #tpu.pipeline_mode<synchronous>, transform_indices = @transform_4, window_bounds = array<i64: 1, 128>}, {pipeline_mode = #tpu.pipeline_mode<synchronous>, transform_indices = @transform_5, window_bounds = array<i64: 128, 128>}, {pipeline_mode = #tpu.pipeline_mode<synchronous>, transform_indices = @transform_6, window_bounds = array<i64: 1, 128>}, {transform_indices = @transform_7, window_bounds = array<i64: 8, 128>}]} {
    %c0 = arith.constant 0 : index
    %c0_0 = arith.constant 0 : index
    %0 = vector.load %arg1[%c0, %c0_0] : memref<8x16xf32, #tpu.memory_space<vmem>>, vector<8x16xf32>
    %1 = arith.truncf %0 : vector<8x16xf32> to vector<8x16xbf16>
    %c0_1 = arith.constant 0 : index
    %c0_2 = arith.constant 0 : index
    %2 = vector.load %arg3[%c0_1, %c0_2] : memref<1x128xf32, #tpu.memory_space<vmem>>, vector<1x128xf32>
    %c0_3 = arith.constant 0 : index
    %c0_4 = arith.constant 0 : index
    %3 = vector.load %arg5[%c0_3, %c0_4] : memref<1x128xf32, #tpu.memory_space<vmem>>, vector<1x128xf32>
    %c0_5 = arith.constant 0 : index
    %c0_6 = arith.constant 0 : index
    %4 = vector.load %arg7[%c0_5, %c0_6] : memref<1x128xf32, #tpu.memory_space<vmem>>, vector<1x128xf32>
    %c0_7 = arith.constant 0 : index
    %c0_8 = arith.constant 0 : index
    %5 = vector.load %arg2[%c0_7, %c0_8] : memref<16x128xbf16, #tpu.memory_space<vmem>>, vector<16x128xbf16>
    %cst = arith.constant dense<0.000000e+00> : vector<8x128xf32>
    %6 = tpu.matmul %1, %5, %cst {dimension_numbers = #tpu.dot_dimension_numbers<[1], [0], [0], [1], [0, 0, 1, 1], [], []>} : vector<8x16xbf16>, vector<16x128xbf16>, vector<8x128xf32> -> vector<8x128xf32>
    %7 = vector.broadcast %2 : vector<1x128xf32> to vector<8x128xf32>
    %8 = arith.addf %6, %7 : vector<8x128xf32>
    %cst_9 = arith.constant 0.000000e+00 : f32
    %9 = vector.broadcast %cst_9 : f32 to vector<8x128xf32>
    %10 = arith.maximumf %8, %9 : vector<8x128xf32>
    %11 = arith.truncf %10 : vector<8x128xf32> to vector<8x128xbf16>
    %c0_10 = arith.constant 0 : index
    %c0_11 = arith.constant 0 : index
    %12 = vector.load %arg4[%c0_10, %c0_11] : memref<128x128xbf16, #tpu.memory_space<vmem>>, vector<128x128xbf16>
    %cst_12 = arith.constant dense<0.000000e+00> : vector<8x128xf32>
    %13 = tpu.matmul %11, %12, %cst_12 {dimension_numbers = #tpu.dot_dimension_numbers<[1], [0], [0], [1], [0, 0, 1, 1], [], []>} : vector<8x128xbf16>, vector<128x128xbf16>, vector<8x128xf32> -> vector<8x128xf32>
    %14 = vector.broadcast %3 : vector<1x128xf32> to vector<8x128xf32>
    %15 = arith.addf %13, %14 : vector<8x128xf32>
    %cst_13 = arith.constant 0.000000e+00 : f32
    %16 = vector.broadcast %cst_13 : f32 to vector<8x128xf32>
    %17 = arith.maximumf %15, %16 : vector<8x128xf32>
    %18 = arith.truncf %17 : vector<8x128xf32> to vector<8x128xbf16>
    %c0_14 = arith.constant 0 : index
    %c0_15 = arith.constant 0 : index
    %19 = vector.load %arg6[%c0_14, %c0_15] : memref<128x128xbf16, #tpu.memory_space<vmem>>, vector<128x128xbf16>
    %cst_16 = arith.constant dense<0.000000e+00> : vector<8x128xf32>
    %20 = tpu.matmul %18, %19, %cst_16 {dimension_numbers = #tpu.dot_dimension_numbers<[1], [0], [0], [1], [0, 0, 1, 1], [], []>} : vector<8x128xbf16>, vector<128x128xbf16>, vector<8x128xf32> -> vector<8x128xf32>
    %21 = vector.broadcast %4 : vector<1x128xf32> to vector<8x128xf32>
    %22 = arith.addf %20, %21 : vector<8x128xf32>
    %c0_17 = arith.constant 0 : index
    %c0_18 = arith.constant 0 : index
    %23 = vector.load %arg8[%c0_17, %c0_18] : memref<8x128xf32, #tpu.memory_space<vmem>>, vector<8x128xf32>
    tpu.vector_store %arg8[%c0_17, %c0_18], %22 {strides = array<i32>} : memref<8x128xf32, #tpu.memory_space<vmem>>, vector<8x128xf32>,
    return
  }
  func.func @transform_0(%arg0: i32) -> (i32, i32) {
    %c0_i32 = arith.constant 0 : i32
    %c0_i32_0 = arith.constant 0 : i32
    return %arg0, %c0_i32 : i32, i32
  }
  func.func @transform_1(%arg0: i32) -> (i32, i32) {
    %c0_i32 = arith.constant 0 : i32
    %c0_i32_0 = arith.constant 0 : i32
    %c0_i32_1 = arith.constant 0 : i32
    return %c0_i32, %c0_i32_0 : i32, i32
  }
  func.func @transform_2(%arg0: i32) -> (i32, i32) {
    %c0_i32 = arith.constant 0 : i32
    %c0_i32_0 = arith.constant 0 : i32
    %c0_i32_1 = arith.constant 0 : i32
    return %c0_i32, %c0_i32_0 : i32, i32
  }
  func.func @transform_3(%arg0: i32) -> (i32, i32) {
    %c0_i32 = arith.constant 0 : i32
    %c0_i32_0 = arith.constant 0 : i32
    %c0_i32_1 = arith.constant 0 : i32
    return %c0_i32, %c0_i32_0 : i32, i32
  }
  func.func @transform_4(%arg0: i32) -> (i32, i32) {
    %c0_i32 = arith.constant 0 : i32
    %c0_i32_0 = arith.constant 0 : i32
    %c0_i32_1 = arith.constant 0 : i32
    return %c0_i32, %c0_i32_0 : i32, i32
  }
  func.func @transform_5(%arg0: i32) -> (i32, i32) {
    %c0_i32 = arith.constant 0 : i32
    %c0_i32_0 = arith.constant 0 : i32
    %c0_i32_1 = arith.constant 0 : i32
    return %c0_i32, %c0_i32_0 : i32, i32
  }
  func.func @transform_6(%arg0: i32) -> (i32, i32) {
    %c0_i32 = arith.constant 0 : i32
    %c0_i32_0 = arith.constant 0 : i32
    %c0_i32_1 = arith.constant 0 : i32
    return %c0_i32, %c0_i32_0 : i32, i32
  }
  func.func @transform_7(%arg0: i32) -> (i32, i32) {
    %c0_i32 = arith.constant 0 : i32
    %c0_i32_0 = arith.constant 0 : i32
    return %arg0, %c0_i32 : i32, i32
  }
}

</mosaic_0001>

<llo_original>
// kernel: dqn_forward.1
$region0: #{dqn_forward.1}
  #allocation0 [shape = 'u32[]', space=smem, size = 0x4, offset = 0x4, fixed_abs, tag = 'smem constant byte address 0x4 - core index']
  #allocation1 [shape = 'u32[144,128]{1,0:T(1,128)}', space=vmem, size = 0x12000, scoped, tag = 'internal scratch']
  %s0 = inlined_call_operand.vmem [shape: f32[8,16], index: 0, kind: input, shape index: {}]
  %s1 = inlined_call_operand.vmem [shape: bf16[16,128], index: 1, kind: input, shape index: {}]
  %s2 = inlined_call_operand.vmem [shape: f32[1,128], index: 2, kind: input, shape index: {}]
  %s3 = inlined_call_operand.vmem [shape: bf16[128,128], index: 3, kind: input, shape index: {}]
  %s4 = inlined_call_operand.vmem [shape: f32[1,128], index: 4, kind: input, shape index: {}]
  %s5 = inlined_call_operand.vmem [shape: bf16[128,128], index: 5, kind: input, shape index: {}]
  %s6 = inlined_call_operand.vmem [shape: f32[1,128], index: 6, kind: input, shape index: {}]
  %s7 = inlined_call_operand.vmem [shape: f32[8,128], index: 7, kind: output, shape index: {}]
  %s8 = sld [smem:[#allocation0]]
  $region38: #{dqn_forward.1} parent=0
    _
  %s10 = ssub.s32 1, %s8
  %s11 = scalar_select 0, %s10, %s8
  // Predicated region
  $region2: #{dqn_forward.1} parent=0 // pred_check
    _
  $region3: #{dqn_forward.1} parent=0 // pred_check_branch
    %13 = sbr.rel (0) target = $region5
  $region4: #{dqn_forward.1} parent=0 // pred_region
    _
  $region5: #{dqn_forward.1} parent=0 // pred_fallthru
    _
  // Predicated region
  $region6: #{dqn_forward.1} parent=0 // pred_check
    _
  $region7: #{dqn_forward.1} parent=0 // pred_check_branch
    %15 = sbr.rel (0) target = $region9
  $region8: #{dqn_forward.1} parent=0 // pred_region
    _
  $region9: #{dqn_forward.1} parent=0 // pred_fallthru
    _
  // Predicated region
  $region10: #{dqn_forward.1} parent=0 // pred_check
    _
  $region11: #{dqn_forward.1} parent=0 // pred_check_branch
    %17 = sbr.rel (0) target = $region13
  $region12: #{dqn_forward.1} parent=0 // pred_region
    _
  $region13: #{dqn_forward.1} parent=0 // pred_fallthru
    _
  // Predicated region
  $region14: #{dqn_forward.1} parent=0 // pred_check
    _
  $region15: #{dqn_forward.1} parent=0 // pred_check_branch
    %19 = sbr.rel (0) target = $region17
  $region16: #{dqn_forward.1} parent=0 // pred_region
    _
  $region17: #{dqn_forward.1} parent=0 // pred_fallthru
    _
  // Predicated region
  $region18: #{dqn_forward.1} parent=0 // pred_check
    _
  $region19: #{dqn_forward.1} parent=0 // pred_check_branch
    %21 = sbr.rel (0) target = $region21
  $region20: #{dqn_forward.1} parent=0 // pred_region
    _
  $region21: #{dqn_forward.1} parent=0 // pred_fallthru
    _
  // Predicated region
  $region22: #{dqn_forward.1} parent=0 // pred_check
    _
  $region23: #{dqn_forward.1} parent=0 // pred_check_branch
    %23 = sbr.rel (0) target = $region25
  $region24: #{dqn_forward.1} parent=0 // pred_region
    _
  $region25: #{dqn_forward.1} parent=0 // pred_fallthru
    _
  // Predicated region
  $region26: #{dqn_forward.1} parent=0 // pred_check
    _
  $region27: #{dqn_forward.1} parent=0 // pred_check_branch
    %25 = sbr.rel (0) target = $region29
  $region28: #{dqn_forward.1} parent=0 // pred_region
    _
  $region29: #{dqn_forward.1} parent=0 // pred_fallthru
    _
  %v27 = vld [vmem:[%s0] sm:$0xff]
  %v28 = vpack.c.bf16 %v27, %v27
  %v29 = vld [vmem:[%s2] sm:$0x1]
  %v30 = vld [vmem:[%s4] sm:$0x1]
  %v31 = vld [vmem:[%s6] sm:$0x1]
  %v32 = vld [vmem:[%s1] sm:$0xf]
  %v33 = vld [vmem:[%s1 + $0x4] sm:$0xf]
  %v35 = vlaneseq
  %v36 = vshrl.u32 %v35, 7
  %v37 = vsub.s32 0, %v36
  %v38 = vrot.slane %v29, %v37
  %v42 = vunpack.c.l.b16 %v32
  %v43 = vunpack.c.l.b16 %v33
  %v44 = vpack.c.b16 %v43, %v42
  %vm46 = vcmask 130048
  %v48 = vsel %vm46, %v28, 0
  %50 = vmatprep.subr.bf16.mxu0 0
  %51 = vmatpush1.bf16.msra.mxu0 0
  %52 = vmatprep.subr.bf16.mxu0 0
  %53 = vmatpush1.bf16.msra.mxu0 0
  %54 = vmatprep.subr.bf16.mxu0 0
  %55 = vmatpush1.bf16.msra.mxu0 0
  %56 = vmatprep.subr.bf16.mxu0 0
  %57 = vmatpush1.bf16.msra.mxu0 0
  %58 = vmatprep.subr.bf16.mxu0 0
  %59 = vmatpush1.bf16.msra.mxu0 0
  %60 = vmatprep.subr.bf16.mxu0 0
  %61 = vmatpush1.bf16.msra.mxu0 0
  %62 = vmatprep.subr.bf16.mxu0 0
  %63 = vmatpush1.bf16.msra.mxu0 0
  %64 = vmatprep.subr.bf16.mxu0 0
  %65 = vmatpush1.bf16.msra.mxu0 %v44
  %66 = vmatprep.subr.bf16.mxu0 0
  %67 = vmatpush2.bf16.msra.mxu0 0
  %68 = vmatprep.subr.bf16.mxu0 0
  %69 = vmatpush2.bf16.msra.mxu0 0
  %70 = vmatprep.subr.bf16.mxu0 0
  %71 = vmatpush2.bf16.msra.mxu0 0
  %72 = vmatprep.subr.bf16.mxu0 0
  %73 = vmatpush2.bf16.msra.mxu0 0
  %74 = vmatprep.subr.bf16.mxu0 0
  %75 = vmatpush2.bf16.msra.mxu0 0
  %76 = vmatprep.subr.bf16.mxu0 0
  %77 = vmatpush2.bf16.msra.mxu0 0
  %78 = vmatprep.subr.bf16.mxu0 0
  %79 = vmatpush2.bf16.msra.mxu0 0
  %80 = vmatprep.subr.bf16.mxu0 0
  %81 = vmatpush2.bf16.msra.mxu0 0
  %82 = vmatprep.mubr.bf16.mxu0 0
  %83 = vmatmul.mubr.bf16.gmra.mxu0 %v48
  %v84 = vpop.f32.mrf.mxu0
  %v85 = vadd.f32 %v38, %v84
  %v86 = vpop.f32.mrf.mxu0
  %v87 = vpop.f32.mrf.mxu0
  %v88 = vpop.f32.mrf.mxu0
  %89 = vdwg.mxu0
  %v90 = vmax.f32 %v85, 0.0
  %v91 = vpack.c.bf16 %v90, %v90
  %v92 = vld [vmem:[%s3] sm:$0xf]
  %v93 = vld [vmem:[%s3 + $0x4] sm:$0xf]
  %v94 = vld [vmem:[%s3 + $0x8] sm:$0xf]
  %v95 = vld [vmem:[%s3 + $0xc] sm:$0xf]
  %v96 = vld [vmem:[%s3 + $0x10] sm:$0xf]
  %v97 = vld [vmem:[%s3 + $0x14] sm:$0xf]
  %v98 = vld [vmem:[%s3 + $0x18] sm:$0xf]
  %v99 = vld [vmem:[%s3 + $0x1c] sm:$0xf]
  %v100 = vld [vmem:[%s3 + $0x20] sm:$0xf]
  %v101 = vld [vmem:[%s3 + $0x24] sm:$0xf]
  %v102 = vld [vmem:[%s3 + $0x28] sm:$0xf]
  %v103 = vld [vmem:[%s3 + $0x2c] sm:$0xf]
  %v104 = vld [vmem:[%s3 + $0x30] sm:$0xf]
  %v105 = vld [vmem:[%s3 + $0x34] sm:$0xf]
  %v106 = vld [vmem:[%s3 + $0x38] sm:$0xf]
  %v107 = vld [vmem:[%s3 + $0x3c] sm:$0xf]
  %v109 = vlaneseq
  %v110 = vshrl.u32 %v109, 7
  %v111 = vsub.s32 0, %v110
  %v112 = vrot.slane %v30, %v111
  %v130 = vunpack.c.l.b16 %v92
  %v131 = vunpack.c.l.b16 %v93
  %v132 = vunpack.c.l.b16 %v94
  %v133 = vunpack.c.l.b16 %v95
  %v134 = vunpack.c.l.b16 %v96
  %v135 = vunpack.c.l.b16 %v97
  %v136 = vunpack.c.l.b16 %v98
  %v137 = vunpack.c.l.b16 %v99
  %v138 = vunpack.c.l.b16 %v100
  %v139 = vunpack.c.l.b16 %v101
  %v140 = vunpack.c.l.b16 %v102
  %v141 = vunpack.c.l.b16 %v103
  %v142 = vunpack.c.l.b16 %v104
  %v143 = vunpack.c.l.b16 %v105
  %v144 = vunpack.c.l.b16 %v106
  %v145 = vunpack.c.l.b16 %v107
  %v146 = vpack.c.b16 %v131, %v130
  %v147 = vpack.c.b16 %v133, %v132
  %v148 = vpack.c.b16 %v135, %v134
  %v149 = vpack.c.b16 %v137, %v136
  %v150 = vpack.c.b16 %v139, %v138
  %v151 = vpack.c.b16 %v141, %v140
  %v152 = vpack.c.b16 %v143, %v142
  %v153 = vpack.c.b16 %v145, %v144
  %162 = vmatprep.subr.bf16.mxu0 0
  %163 = vmatpush1.bf16.msra.mxu0 %v153
  %164 = vmatprep.subr.bf16.mxu0 0
  %165 = vmatpush1.bf16.msra.mxu0 %v152
  %166 = vmatprep.subr.bf16.mxu0 0
  %167 = vmatpush1.bf16.msra.mxu0 %v151
  %168 = vmatprep.subr.bf16.mxu0 0
  %169 = vmatpush1.bf16.msra.mxu0 %v150
  %170 = vmatprep.subr.bf16.mxu0 0
  %171 = vmatpush1.bf16.msra.mxu0 %v149
  %172 = vmatprep.subr.bf16.mxu0 0
  %173 = vmatpush1.bf16.msra.mxu0 %v148
  %174 = vmatprep.subr.bf16.mxu0 0
  %175 = vmatpush1.bf16.msra.mxu0 %v147
  %176 = vmatprep.subr.bf16.mxu0 0
  %177 = vmatpush1.bf16.msra.mxu0 %v146
  %178 = vmatprep.subr.bf16.mxu0 0
  %179 = vmatpush2.bf16.msra.mxu0 0
  %180 = vmatprep.subr.bf16.mxu0 0
  %181 = vmatpush2.bf16.msra.mxu0 0
  %182 = vmatprep.subr.bf16.mxu0 0
  %183 = vmatpush2.bf16.msra.mxu0 0
  %184 = vmatprep.subr.bf16.mxu0 0
  %185 = vmatpush2.bf16.msra.mxu0 0
  %186 = vmatprep.subr.bf16.mxu0 0
  %187 = vmatpush2.bf16.msra.mxu0 0
  %188 = vmatprep.subr.bf16.mxu0 0
  %189 = vmatpush2.bf16.msra.mxu0 0
  %190 = vmatprep.subr.bf16.mxu0 0
  %191 = vmatpush2.bf16.msra.mxu0 0
  %192 = vmatprep.subr.bf16.mxu0 0
  %193 = vmatpush2.bf16.msra.mxu0 0
  %194 = vmatprep.mubr.bf16.mxu0 0
  %195 = vmatmul.mubr.bf16.gmra.mxu0 %v91
  %v196 = vpop.f32.mrf.mxu0
  %v197 = vadd.f32 %v112, %v196
  %v198 = vpop.f32.mrf.mxu0
  %v199 = vpop.f32.mrf.mxu0
  %v200 = vpop.f32.mrf.mxu0
  %201 = vdwg.mxu0
  %v202 = vmax.f32 %v197, 0.0
  %v203 = vpack.c.bf16 %v202, %v202
  %v204 = vld [vmem:[%s5] sm:$0xf]
  %v205 = vld [vmem:[%s5 + $0x4] sm:$0xf]
  %v206 = vld [vmem:[%s5 + $0x8] sm:$0xf]
  %v207 = vld [vmem:[%s5 + $0xc] sm:$0xf]
  %v208 = vld [vmem:[%s5 + $0x10] sm:$0xf]
  %v209 = vld [vmem:[%s5 + $0x14] sm:$0xf]
  %v210 = vld [vmem:[%s5 + $0x18] sm:$0xf]
  %v211 = vld [vmem:[%s5 + $0x1c] sm:$0xf]
  %v212 = vld [vmem:[%s5 + $0x20] sm:$0xf]
  %v213 = vld [vmem:[%s5 + $0x24] sm:$0xf]
  %v214 = vld [vmem:[%s5 + $0x28] sm:$0xf]
  %v215 = vld [vmem:[%s5 + $0x2c] sm:$0xf]
  %v216 = vld [vmem:[%s5 + $0x30] sm:$0xf]
  %v217 = vld [vmem:[%s5 + $0x34] sm:$0xf]
  %v218 = vld [vmem:[%s5 + $0x38] sm:$0xf]
  %v219 = vld [vmem:[%s5 + $0x3c] sm:$0xf]
  %v221 = vlaneseq
  %v222 = vshrl.u32 %v221, 7
  %v223 = vsub.s32 0, %v222
  %v224 = vrot.slane %v31, %v223
  %v242 = vunpack.c.l.b16 %v204
  %v243 = vunpack.c.l.b16 %v205
  %v244 = vunpack.c.l.b16 %v206
  %v245 = vunpack.c.l.b16 %v207
  %v246 = vunpack.c.l.b16 %v208
  %v247 = vunpack.c.l.b16 %v209
  %v248 = vunpack.c.l.b16 %v210
  %v249 = vunpack.c.l.b16 %v211
  %v250 = vunpack.c.l.b16 %v212
  %v251 = vunpack.c.l.b16 %v213
  %v252 = vunpack.c.l.b16 %v214
  %v253 = vunpack.c.l.b16 %v215
  %v254 = vunpack.c.l.b16 %v216
  %v255 = vunpack.c.l.b16 %v217
  %v256 = vunpack.c.l.b16 %v218
  %v257 = vunpack.c.l.b16 %v219
  %v258 = vpack.c.b16 %v243, %v242
  %v259 = vpack.c.b16 %v245, %v244
  %v260 = vpack.c.b16 %v247, %v246
  %v261 = vpack.c.b16 %v249, %v248
  %v262 = vpack.c.b16 %v251, %v250
  %v263 = vpack.c.b16 %v253, %v252
  %v264 = vpack.c.b16 %v255, %v254
  %v265 = vpack.c.b16 %v257, %v256
  %274 = vmatprep.subr.bf16.mxu0 0
  %275 = vmatpush1.bf16.msra.mxu0 %v265
  %276 = vmatprep.subr.bf16.mxu0 0
  %277 = vmatpush1.bf16.msra.mxu0 %v264
  %278 = vmatprep.subr.bf16.mxu0 0
  %279 = vmatpush1.bf16.msra.mxu0 %v263
  %280 = vmatprep.subr.bf16.mxu0 0
  %281 = vmatpush1.bf16.msra.mxu0 %v262
  %282 = vmatprep.subr.bf16.mxu0 0
  %283 = vmatpush1.bf16.msra.mxu0 %v261
  %284 = vmatprep.subr.bf16.mxu0 0
  %285 = vmatpush1.bf16.msra.mxu0 %v260
  %286 = vmatprep.subr.bf16.mxu0 0
  %287 = vmatpush1.bf16.msra.mxu0 %v259
  %288 = vmatprep.subr.bf16.mxu0 0
  %289 = vmatpush1.bf16.msra.mxu0 %v258
  %290 = vmatprep.subr.bf16.mxu0 0
  %291 = vmatpush2.bf16.msra.mxu0 0
  %292 = vmatprep.subr.bf16.mxu0 0
  %293 = vmatpush2.bf16.msra.mxu0 0
  %294 = vmatprep.subr.bf16.mxu0 0
  %295 = vmatpush2.bf16.msra.mxu0 0
  %296 = vmatprep.subr.bf16.mxu0 0
  %297 = vmatpush2.bf16.msra.mxu0 0
  %298 = vmatprep.subr.bf16.mxu0 0
  %299 = vmatpush2.bf16.msra.mxu0 0
  %300 = vmatprep.subr.bf16.mxu0 0
  %301 = vmatpush2.bf16.msra.mxu0 0
  %302 = vmatprep.subr.bf16.mxu0 0
  %303 = vmatpush2.bf16.msra.mxu0 0
  %304 = vmatprep.subr.bf16.mxu0 0
  %305 = vmatpush2.bf16.msra.mxu0 0
  %306 = vmatprep.mubr.bf16.mxu0 0
  %307 = vmatmul.mubr.bf16.gmra.mxu0 %v203
  %v308 = vpop.f32.mrf.mxu0
  %v309 = vadd.f32 %v224, %v308
  %v310 = vpop.f32.mrf.mxu0
  %v311 = vpop.f32.mrf.mxu0
  %v312 = vpop.f32.mrf.mxu0
  %313 = vdwg.mxu0
  %314 = vst [vmem:[%s7] sm:$0xff] %v309
  // Predicated region
  $region30: #{dqn_forward.1} parent=0 // pred_check
    _
  $region31: #{dqn_forward.1} parent=0 // pred_check_branch
    %316 = sbr.rel (0) target = $region33
  $region32: #{dqn_forward.1} parent=0 // pred_region
    _
  $region33: #{dqn_forward.1} parent=0 // pred_fallthru
    _
  // Predicated region
  $region34: #{dqn_forward.1} parent=0 // pred_check
    _
  $region35: #{dqn_forward.1} parent=0 // pred_check_branch
    %318 = sbr.rel (0) target = $region37
  $region36: #{dqn_forward.1} parent=0 // pred_region
    _
  $region37: #{dqn_forward.1} parent=0 // pred_fallthru
    _

</llo_original>
